<compile_context>
chip_gen: v6e
topology: v6e:2x2x1
jax: 0.10.0
libtpu: 0.0.40
codegen_flags: <defaults>
</compile_context>

<pallas_src>
import jax
import jax.numpy as jnp
from jax.experimental import pallas as pl
from jax.experimental.pallas import tpu as pltpu

# MiniLM-L12-v2 sentence embedding dimension and the module's TEXT_CH
EMBED_DIM = 384
OUT_DIM = 64          # TEXT_CH


def _round_up(x, m):
    return ((x + m - 1) // m) * m


def _fc_kernel(x_ref, w_ref, b_ref, o_ref):
    """One batch tile of the projection: o = x @ W + b (f32 accumulation)."""
    acc = jnp.dot(x_ref[...], w_ref[...], preferred_element_type=jnp.float32)
    # bias is a (1, O) f32 row; the broadcast-add is negligible VPU filler.
    o_ref[...] = (acc + b_ref[...]).astype(o_ref.dtype)


def text_encoder_project(embeddings, weight_t, bias, *,
                         tile_b=2048, out_dtype=None):
    """Pallas implementation of TransformerTextEncoder.fc.

    embeddings: (B, E) sentence embeddings (f32, or bf16 if already bf16 in HBM)
    weight_t:   (E, O) float32   (PyTorch fc.weight transposed)
    bias:       (1, O) float32
    tile_b:     max batch-rows per grid step (clamped to the batch)
    out_dtype:  output dtype (defaults to embeddings.dtype)
    returns:    (B, O)
    """
    B, E = embeddings.shape
    E_w, O = weight_t.shape
    assert E == E_w, "embedding dim mismatch"
    assert bias.shape == (1, O)
    out_dtype = embeddings.dtype if out_dtype is None else out_dtype

    # ---- batch tiling: no padding ------------------------------------------
    # tb is sublane-aligned; the grid is cdiv(B, tb) and Pallas masks the
    # ragged last block's output stores (OOB input rows feed garbage into
    # output rows that are never written back), so no jnp.pad / slice passes.
    tb = min(tile_b, _round_up(B, 8))
    if B > 512 and pl.cdiv(B, tb) < 2:
        # Keep >= 2 steps on the "parallel" axis so v7x shards across both TCs.
        tb = _round_up(pl.cdiv(B, 2), 8)
    grid = (pl.cdiv(B, tb),)

    itemsize_in = jnp.dtype(embeddings.dtype).itemsize
    itemsize_w = jnp.dtype(weight_t.dtype).itemsize
    itemsize_out = jnp.dtype(out_dtype).itemsize
    cost = pl.CostEstimate(
        flops=2 * B * E * O,
        transcendentals=0,
        bytes_accessed=(B * E * itemsize_in
                        + (E * O + O) * itemsize_w
                        + B * O * itemsize_out),
    )

    return pl.pallas_call(
        _fc_kernel,
        out_shape=jax.ShapeDtypeStruct((B, O), out_dtype),
        grid_spec=pltpu.PrefetchScalarGridSpec(
            num_scalar_prefetch=0,
            grid=grid,
            in_specs=[
                # batch tile of embeddings (dominant HBM traffic)
                pl.BlockSpec((tb, E), lambda i: (i, 0)),
                # full weight, block-invariant -> stays resident in VMEM
                pl.BlockSpec((E, O), lambda i: (0, 0)),
                # bias row, also resident
                pl.BlockSpec((1, O), lambda i: (0, 0)),
            ],
            out_specs=pl.BlockSpec((tb, O), lambda i: (i, 0)),
        ),
        compiler_params=pltpu.CompilerParams(
            dimension_semantics=("parallel",)),
        cost_estimate=cost,
    )(embeddings, weight_t, bias)


def init_params(key, embed_dim=EMBED_DIM, out_dim=OUT_DIM):
    """Deterministic init matching nn.Linear(embed_dim, out_dim) shapes."""
    kw, kb = jax.random.split(key)
    bound = 1.0 / jnp.sqrt(embed_dim)
    # PyTorch fc.weight is (out_dim, embed_dim); store transposed for the kernel.
    weight_t = jax.random.uniform(
        kw, (embed_dim, out_dim), jnp.float32, minval=-bound, maxval=bound)
    bias = jax.random.uniform(
        kb, (1, out_dim), jnp.float32, minval=-bound, maxval=bound)
    return weight_t, bias


if __name__ == "__main__":
    # TODO(synk): SentenceTransformer.encode (tokenization + pretrained MiniLM)
    # is an external model; we feed synthetic sentence embeddings instead.
    key = jax.random.PRNGKey(0)
    k_emb, k_params = jax.random.split(key)

    batch = 6  # number of "texts" (deliberately not sublane-aligned)
    embeddings = jax.random.normal(k_emb, (batch, EMBED_DIM), jnp.float32)
    weight_t, bias = init_params(k_params)

    projected = text_encoder_project(embeddings, weight_t, bias)
    projected = jax.block_until_ready(projected)

    # Sanity check against a plain-JAX reference of the same forward.
    ref = embeddings @ weight_t + bias
    assert projected.shape == (batch, OUT_DIM)
    assert jnp.allclose(projected, ref, atol=1e-5, rtol=1e-5)

    print("KERNEL_OK")
</pallas_src>

<mosaic_0001>
module attributes {stable_mosaic.version = 11 : i64} {
  func.func @_fc_kernel(%arg0: i32, %arg1: memref<8x384xf32, #tpu.memory_space<vmem>>, %arg2: memref<384x64xf32, #tpu.memory_space<vmem>>, %arg3: memref<1x64xf32, #tpu.memory_space<vmem>>, %arg4: memref<8x64xf32, #tpu.memory_space<vmem>>) attributes {dimension_semantics = [#tpu.dimension_semantics<parallel>], iteration_bounds = array<i64: 1>, scalar_prefetch = 0 : i64, scratch_operands = 0 : i64, tpu.core_type = #tpu.core_type<tc>, window_params = [{transform_indices = @transform_0, window_bounds = array<i64: 8, 384>}, {pipeline_mode = #tpu.pipeline_mode<synchronous>, transform_indices = @transform_1, window_bounds = array<i64: 384, 64>}, {pipeline_mode = #tpu.pipeline_mode<synchronous>, transform_indices = @transform_2, window_bounds = array<i64: 1, 64>}, {transform_indices = @transform_3, window_bounds = array<i64: 8, 64>}]} {
    %c0 = arith.constant 0 : index
    %c0_0 = arith.constant 0 : index
    %0 = vector.load %arg1[%c0, %c0_0] : memref<8x384xf32, #tpu.memory_space<vmem>>, vector<8x384xf32>
    %c0_1 = arith.constant 0 : index
    %c0_2 = arith.constant 0 : index
    %1 = vector.load %arg2[%c0_1, %c0_2] : memref<384x64xf32, #tpu.memory_space<vmem>>, vector<384x64xf32>
    %cst = arith.constant dense<0.000000e+00> : vector<8x64xf32>
    %2 = tpu.matmul %0, %1, %cst {dimension_numbers = #tpu.dot_dimension_numbers<[1], [0], [0], [1], [0, 0, 1, 1], [], []>} : vector<8x384xf32>, vector<384x64xf32>, vector<8x64xf32> -> vector<8x64xf32>
    %c0_3 = arith.constant 0 : index
    %c0_4 = arith.constant 0 : index
    %3 = vector.load %arg3[%c0_3, %c0_4] : memref<1x64xf32, #tpu.memory_space<vmem>>, vector<1x64xf32>
    %4 = vector.broadcast %3 : vector<1x64xf32> to vector<8x64xf32>
    %5 = arith.addf %2, %4 : vector<8x64xf32>
    %c0_5 = arith.constant 0 : index
    %c0_6 = arith.constant 0 : index
    %6 = vector.load %arg4[%c0_5, %c0_6] : memref<8x64xf32, #tpu.memory_space<vmem>>, vector<8x64xf32>
    tpu.vector_store %arg4[%c0_5, %c0_6], %5 {strides = array<i32>} : memref<8x64xf32, #tpu.memory_space<vmem>>, vector<8x64xf32>,
    return
  }
  func.func @transform_0(%arg0: i32) -> (i32, i32) {
    %c0_i32 = arith.constant 0 : i32
    %c0_i32_0 = arith.constant 0 : i32
    return %arg0, %c0_i32 : i32, i32
  }
  func.func @transform_1(%arg0: i32) -> (i32, i32) {
    %c0_i32 = arith.constant 0 : i32
    %c0_i32_0 = arith.constant 0 : i32
    %c0_i32_1 = arith.constant 0 : i32
    return %c0_i32, %c0_i32_0 : i32, i32
  }
  func.func @transform_2(%arg0: i32) -> (i32, i32) {
    %c0_i32 = arith.constant 0 : i32
    %c0_i32_0 = arith.constant 0 : i32
    %c0_i32_1 = arith.constant 0 : i32
    return %c0_i32, %c0_i32_0 : i32, i32
  }
  func.func @transform_3(%arg0: i32) -> (i32, i32) {
    %c0_i32 = arith.constant 0 : i32
    %c0_i32_0 = arith.constant 0 : i32
    return %arg0, %c0_i32 : i32, i32
  }
}

</mosaic_0001>

<llo_original>
// kernel: tpu_custom_call.1
$region0: #{tpu_custom_call.1}
  #allocation0 [shape = 'u32[]', space=smem, size = 0x4, offset = 0x4, fixed_abs, tag = 'smem constant byte address 0x4 - core index']
  #allocation1 [shape = 'u32[144,128]{1,0:T(1,128)}', space=vmem, size = 0x12000, scoped, tag = 'internal scratch']
  %s0 = inlined_call_operand.vmem [shape: f32[6,384], index: 0, kind: input, shape index: {}]
  %s1 = inlined_call_operand.vmem [shape: f32[384,64], index: 1, kind: input, shape index: {}]
  %s2 = inlined_call_operand.vmem [shape: f32[1,64], index: 2, kind: input, shape index: {}]
  %s3 = inlined_call_operand.hbm [shape: f32[6,64], index: 3, kind: output, shape index: {}]
  %s4 = sld [smem:[#allocation0]]
  $region22: #{tpu_custom_call.1} parent=0
    _
  %s6 = ssub.s32 1, %s4
  %s7 = scalar_select 0, %s6, %s4
  $region1: #{tpu_custom_call.1} parent=0
    #allocation2 [shape = 'u8[4096]{0}', space=vmem, size = 0x1000, scoped, tag = 'output window, operand 0, single buffered']
    #allocation3 [shape = 's32[1]{0}', space=sflag, size = 0x4, scoped, tag = 'scoped memory for tpu_custom_call.1']
    %8 = vsyncpa [#allocation3], 0
    // Predicated region
    $region2: #{tpu_custom_call.1} parent=1 // pred_check
      _
    $region3: #{tpu_custom_call.1} parent=1 // pred_check_branch
      %10 = sbr.rel (0) target = $region5
    $region4: #{tpu_custom_call.1} parent=1 // pred_region
      _
    $region5: #{tpu_custom_call.1} parent=1 // pred_fallthru
      _
    // Predicated region
    $region6: #{tpu_custom_call.1} parent=1 // pred_check
      _
    $region7: #{tpu_custom_call.1} parent=1 // pred_check_branch
      %12 = sbr.rel (0) target = $region9
    $region8: #{tpu_custom_call.1} parent=1 // pred_region
      _
    $region9: #{tpu_custom_call.1} parent=1 // pred_fallthru
      _
    // Predicated region
    $region10: #{tpu_custom_call.1} parent=1 // pred_check
      _
    $region11: #{tpu_custom_call.1} parent=1 // pred_check_branch
      %14 = sbr.rel (0) target = $region13
    $region12: #{tpu_custom_call.1} parent=1 // pred_region
      _
    $region13: #{tpu_custom_call.1} parent=1 // pred_fallthru
      _
    %v15 = vld [vmem:[%s0] sm:$0xff]
    %v16 = vld [vmem:[%s0 + $0x8] sm:$0xff]
    %v17 = vld [vmem:[%s0 + $0x10] sm:$0xff]
    %v18 = vld [vmem:[%s1] sm:$0xff]
    %v19 = vld [vmem:[%s1 + $0x8] sm:$0xff]
    %v20 = vld [vmem:[%s1 + $0x10] sm:$0xff]
    %v21 = vld [vmem:[%s1 + $0x18] sm:$0xff]
    %v22 = vld [vmem:[%s1 + $0x20] sm:$0xff]
    %v23 = vld [vmem:[%s1 + $0x28] sm:$0xff]
    %v24 = vld [vmem:[%s1 + $0x30] sm:$0xff]
    %v25 = vld [vmem:[%s1 + $0x38] sm:$0xff]
    %v26 = vld [vmem:[%s1 + $0x40] sm:$0xff]
    %v27 = vld [vmem:[%s1 + $0x48] sm:$0xff]
    %v28 = vld [vmem:[%s1 + $0x50] sm:$0xff]
    %v29 = vld [vmem:[%s1 + $0x58] sm:$0xff]
    %v30 = vld [vmem:[%s1 + $0x60] sm:$0xff]
    %v31 = vld [vmem:[%s1 + $0x68] sm:$0xff]
    %v32 = vld [vmem:[%s1 + $0x70] sm:$0xff]
    %v33 = vld [vmem:[%s1 + $0x78] sm:$0xff]
    %v34 = vld [vmem:[%s1 + $0x80] sm:$0xff]
    %v35 = vld [vmem:[%s1 + $0x88] sm:$0xff]
    %v36 = vld [vmem:[%s1 + $0x90] sm:$0xff]
    %v37 = vld [vmem:[%s1 + $0x98] sm:$0xff]
    %v38 = vld [vmem:[%s1 + $0xa0] sm:$0xff]
    %v39 = vld [vmem:[%s1 + $0xa8] sm:$0xff]
    %v40 = vld [vmem:[%s1 + $0xb0] sm:$0xff]
    %v41 = vld [vmem:[%s1 + $0xb8] sm:$0xff]
    %v42 = vld [vmem:[%s1 + $0xc0] sm:$0xff]
    %v43 = vld [vmem:[%s1 + $0xc8] sm:$0xff]
    %v44 = vld [vmem:[%s1 + $0xd0] sm:$0xff]
    %v45 = vld [vmem:[%s1 + $0xd8] sm:$0xff]
    %v46 = vld [vmem:[%s1 + $0xe0] sm:$0xff]
    %v47 = vld [vmem:[%s1 + $0xe8] sm:$0xff]
    %v48 = vld [vmem:[%s1 + $0xf0] sm:$0xff]
    %v49 = vld [vmem:[%s1 + $0xf8] sm:$0xff]
    %v50 = vld [vmem:[%s1 + $0x100] sm:$0xff]
    %v51 = vld [vmem:[%s1 + $0x108] sm:$0xff]
    %v52 = vld [vmem:[%s1 + $0x110] sm:$0xff]
    %v53 = vld [vmem:[%s1 + $0x118] sm:$0xff]
    %v54 = vld [vmem:[%s1 + $0x120] sm:$0xff]
    %v55 = vld [vmem:[%s1 + $0x128] sm:$0xff]
    %v56 = vld [vmem:[%s1 + $0x130] sm:$0xff]
    %v57 = vld [vmem:[%s1 + $0x138] sm:$0xff]
    %v58 = vld [vmem:[%s1 + $0x140] sm:$0xff]
    %v59 = vld [vmem:[%s1 + $0x148] sm:$0xff]
    %v60 = vld [vmem:[%s1 + $0x150] sm:$0xff]
    %v61 = vld [vmem:[%s1 + $0x158] sm:$0xff]
    %v62 = vld [vmem:[%s1 + $0x160] sm:$0xff]
    %v63 = vld [vmem:[%s1 + $0x168] sm:$0xff]
    %v64 = vld [vmem:[%s1 + $0x170] sm:$0xff]
    %v65 = vld [vmem:[%s1 + $0x178] sm:$0xff]
    %v66 = vld [vmem:[%s2] sm:$0x1]
    %v68 = vlaneseq
    %v69 = vshrl.u32 %v68, 7
    %v70 = vsub.s32 0, %v69
    %v71 = vrot.slane %v66, %v70
    %73 = vmatprep.subr.mxu0 0.0
    %74 = vmatpush1.msra.mxu0 %v33
    %75 = vmatprep.subr.mxu0 0.0
    %76 = vmatpush1.msra.mxu0 %v32
    %77 = vmatprep.subr.mxu0 0.0
    %78 = vmatpush1.msra.mxu0 %v31
    %79 = vmatprep.subr.mxu0 0.0
    %80 = vmatpush1.msra.mxu0 %v30
    %81 = vmatprep.subr.mxu0 0.0
    %82 = vmatpush1.msra.mxu0 %v29
    %83 = vmatprep.subr.mxu0 0.0
    %84 = vmatpush1.msra.mxu0 %v28
    %85 = vmatprep.subr.mxu0 0.0
    %86 = vmatpush1.msra.mxu0 %v27
    %87 = vmatprep.subr.mxu0 0.0
    %88 = vmatpush1.msra.mxu0 %v26
    %89 = vmatprep.subr.mxu0 0.0
    %90 = vmatpush1.msra.mxu0 %v25
    %91 = vmatprep.subr.mxu0 0.0
    %92 = vmatpush1.msra.mxu0 %v24
    %93 = vmatprep.subr.mxu0 0.0
    %94 = vmatpush1.msra.mxu0 %v23
    %95 = vmatprep.subr.mxu0 0.0
    %96 = vmatpush1.msra.mxu0 %v22
    %97 = vmatprep.subr.mxu0 0.0
    %98 = vmatpush1.msra.mxu0 %v21
    %99 = vmatprep.subr.mxu0 0.0
    %100 = vmatpush1.msra.mxu0 %v20
    %101 = vmatprep.subr.mxu0 0.0
    %102 = vmatpush1.msra.mxu0 %v19
    %103 = vmatprep.subr.mxu0 0.0
    %104 = vmatpush1.msra.mxu0 %v18
    %105 = vmatprep.subr.mxu0 0.0
    %106 = vmatpush2.msra.mxu0 %v49
    %107 = vmatprep.subr.mxu0 0.0
    %108 = vmatpush2.msra.mxu0 %v48
    %109 = vmatprep.subr.mxu0 0.0
    %110 = vmatpush2.msra.mxu0 %v47
    %111 = vmatprep.subr.mxu0 0.0
    %112 = vmatpush2.msra.mxu0 %v46
    %113 = vmatprep.subr.mxu0 0.0
    %114 = vmatpush2.msra.mxu0 %v45
    %115 = vmatprep.subr.mxu0 0.0
    %116 = vmatpush2.msra.mxu0 %v44
    %117 = vmatprep.subr.mxu0 0.0
    %118 = vmatpush2.msra.mxu0 %v43
    %119 = vmatprep.subr.mxu0 0.0
    %120 = vmatpush2.msra.mxu0 %v42
    %121 = vmatprep.subr.mxu0 0.0
    %122 = vmatpush2.msra.mxu0 %v41
    %123 = vmatprep.subr.mxu0 0.0
    %124 = vmatpush2.msra.mxu0 %v40
    %125 = vmatprep.subr.mxu0 0.0
    %126 = vmatpush2.msra.mxu0 %v39
    %127 = vmatprep.subr.mxu0 0.0
    %128 = vmatpush2.msra.mxu0 %v38
    %129 = vmatprep.subr.mxu0 0.0
    %130 = vmatpush2.msra.mxu0 %v37
    %131 = vmatprep.subr.mxu0 0.0
    %132 = vmatpush2.msra.mxu0 %v36
    %133 = vmatprep.subr.mxu0 0.0
    %134 = vmatpush2.msra.mxu0 %v35
    %135 = vmatprep.subr.mxu0 0.0
    %136 = vmatpush2.msra.mxu0 %v34
    %137 = vmatprep.mubr.f32.mxu0 %v16
    %138 = vmatmul.mubr.f32.gmra.mxu0 %v15
    %v139 = vpop.f32.mrf.mxu0
    %v140 = vadd.f32 %v71, %v139
    %v141 = vpop.f32.mrf.mxu0
    %142 = vdwg.mxu0
    %143 = vmatprep.subr.mxu0 0.0
    %144 = vmatpush1.msra.mxu0 %v65
    %145 = vmatprep.subr.mxu0 0.0
    %146 = vmatpush1.msra.mxu0 %v64
    %147 = vmatprep.subr.mxu0 0.0
    %148 = vmatpush1.msra.mxu0 %v63
    %149 = vmatprep.subr.mxu0 0.0
    %150 = vmatpush1.msra.mxu0 %v62
    %151 = vmatprep.subr.mxu0 0.0
    %152 = vmatpush1.msra.mxu0 %v61
    %153 = vmatprep.subr.mxu0 0.0
    %154 = vmatpush1.msra.mxu0 %v60
    %155 = vmatprep.subr.mxu0 0.0
    %156 = vmatpush1.msra.mxu0 %v59
    %157 = vmatprep.subr.mxu0 0.0
    %158 = vmatpush1.msra.mxu0 %v58
    %159 = vmatprep.subr.mxu0 0.0
    %160 = vmatpush1.msra.mxu0 %v57
    %161 = vmatprep.subr.mxu0 0.0
    %162 = vmatpush1.msra.mxu0 %v56
    %163 = vmatprep.subr.mxu0 0.0
    %164 = vmatpush1.msra.mxu0 %v55
    %165 = vmatprep.subr.mxu0 0.0
    %166 = vmatpush1.msra.mxu0 %v54
    %167 = vmatprep.subr.mxu0 0.0
    %168 = vmatpush1.msra.mxu0 %v53
    %169 = vmatprep.subr.mxu0 0.0
    %170 = vmatpush1.msra.mxu0 %v52
    %171 = vmatprep.subr.mxu0 0.0
    %172 = vmatpush1.msra.mxu0 %v51
    %173 = vmatprep.subr.mxu0 0.0
    %174 = vmatpush1.msra.mxu0 %v50
    %175 = vmatprep.subr.mxu0 0.0
    %176 = vmatpush2.msra.mxu0 0.0
    %177 = vmatprep.subr.mxu0 0.0
    %178 = vmatpush2.msra.mxu0 0.0
    %179 = vmatprep.subr.mxu0 0.0
    %180 = vmatpush2.msra.mxu0 0.0
    %181 = vmatprep.subr.mxu0 0.0
    %182 = vmatpush2.msra.mxu0 0.0
    %183 = vmatprep.subr.mxu0 0.0
    %184 = vmatpush2.msra.mxu0 0.0
    %185 = vmatprep.subr.mxu0 0.0
    %186 = vmatpush2.msra.mxu0 0.0
    %187 = vmatprep.subr.mxu0 0.0
    %188 = vmatpush2.msra.mxu0 0.0
    %189 = vmatprep.subr.mxu0 0.0
    %190 = vmatpush2.msra.mxu0 0.0
    %191 = vmatprep.subr.mxu0 0.0
    %192 = vmatpush2.msra.mxu0 0.0
    %193 = vmatprep.subr.mxu0 0.0
    %194 = vmatpush2.msra.mxu0 0.0
    %195 = vmatprep.subr.mxu0 0.0
    %196 = vmatpush2.msra.mxu0 0.0
    %197 = vmatprep.subr.mxu0 0.0
    %198 = vmatpush2.msra.mxu0 0.0
    %199 = vmatprep.subr.mxu0 0.0
    %200 = vmatpush2.msra.mxu0 0.0
    %201 = vmatprep.subr.mxu0 0.0
    %202 = vmatpush2.msra.mxu0 0.0
    %203 = vmatprep.subr.mxu0 0.0
    %204 = vmatpush2.msra.mxu0 0.0
    %205 = vmatprep.subr.mxu0 0.0
    %206 = vmatpush2.msra.mxu0 0.0
    %207 = vmatprep.mubr.f32.mxu0 0.0
    %208 = vmatmul.mubr.f32.gmra.mxu0 %v17
    %v209 = vpop.f32.mrf.mxu0
    %v210 = vadd.f32 %v140, %v209
    %v211 = vpop.f32.mrf.mxu0
    %212 = vdwg.mxu0
    %vm213 = vcmask 523264
    %214 = vst.msk [vmem:[#allocation2] sm:$0xff] %vm213, %v210
    // Predicated region
    $region14: #{tpu_custom_call.1} parent=1 // pred_check
      _
    $region15: #{tpu_custom_call.1} parent=1 // pred_check_branch
      %216 = sbr.rel (0) target = $region17
    $region16: #{tpu_custom_call.1} parent=1 // pred_region
      %s218 = ssub.s32 128, 128
      %219 = vsyncadd [#allocation3], %s218
      %s221 = sshll.u32 [#allocation2], 4
      %s222 = int_to_ptr.vmem [resolvable:$true] %s221
      %224 = dma.vmem_to_hbm [thread:$0]  %s222, 128, %s3, [#allocation3]
    $region17: #{tpu_custom_call.1} parent=1 // pred_fallthru
      _
    // Predicated region
    $region18: #{tpu_custom_call.1} parent=1 // pred_check
      _
    $region19: #{tpu_custom_call.1} parent=1 // pred_check_branch
      %226 = sbr.rel (0) target = $region21
    $region20: #{tpu_custom_call.1} parent=1 // pred_region
      %227 = dma.done [#allocation3], 128
    $region21: #{tpu_custom_call.1} parent=1 // pred_fallthru
      _
    %228 = vsyncpa [#allocation3], 1

</llo_original>
